<compile_context>
chip_gen: v6e
topology: v6e:2x2x1
jax: 0.10.0
libtpu: 0.0.40
codegen_flags: <defaults>
</compile_context>

<pallas_src>
import functools

import numpy as np
import jax
import jax.numpy as jnp
from jax.experimental import pallas as pl
from jax.experimental.pallas import tpu as pltpu

_LANE = 128
_SUBLANE = 8


def _round_up(x, m):
    return (x + m - 1) // m * m


def _pad2d(a, rows, cols):
    r, c = a.shape
    if r == rows and c == cols:
        return a
    return jnp.pad(a, ((0, rows - r), (0, cols - c)))


def build_out_ind(num_mods):
    """Replicates GeneralGatingNN.__init__ chunk bookkeeping (static Python data)."""
    num_out = [[1]] + [
        [num_mods[i - 1] for _ in range(num_mods[i])] for i in range(1, len(num_mods))
    ]
    count = 0
    out_ind = []
    for row in num_out:
        this = []
        for n in row:
            this.append((count, count + n))
            count += n
        out_ind.append(this)
    return out_ind, count


def _gating_kernel(x_ref, w1_ref, shift_ref, w2_ref, seg_ref,
                   raw_ref, prob_ref, *, chunk_bounds, count):
    # Layer 1 on the MXU: x @ (W1*scale)  (scale folded host-side), f32 accum.
    h = jnp.dot(x_ref[...], w1_ref[...], preferred_element_type=jnp.float32)
    # Folded eval-mode BatchNorm shift + ReLU on the VPU, f32.
    h = jnp.maximum(h + shift_ref[...], 0.0)
    # Layer 2 (gating logits), still fused -- the activation never leaves the core.
    y = jnp.dot(h.astype(w2_ref.dtype), w2_ref[...],
                preferred_element_type=jnp.float32)
    raw_ref[...] = y.astype(raw_ref.dtype)

    # --- Segmented softmax over static out_ind chunks -----------------------
    # 1) per-chunk maxima: one masked XLU reduction per (small) chunk, scattered
    #    back to lanes with a select.  Static loop -> fully unrolled.
    lanes = jax.lax.broadcasted_iota(jnp.int32, (1, y.shape[-1]), 1)
    neg_inf = jnp.float32(-jnp.inf)
    m_lanes = jnp.zeros_like(y)
    for lo, hi in chunk_bounds:                    # static, fully unrolled
        mask = (lanes >= lo) & (lanes < hi)
        cmax = jnp.max(jnp.where(mask, y, neg_inf), axis=-1, keepdims=True)
        m_lanes = jnp.where(mask, cmax, m_lanes)
    # 2) one full-width exp on the EUP (padding lanes forced to 0).
    e = jnp.where(lanes < count, jnp.exp(y - m_lanes), 0.0)
    # 3) per-chunk denominators via ONE small MXU matmul with the block-diagonal
    #    segment-sum matrix (denom[b, p] = sum of e over p's chunk).
    denom = jnp.dot(e, seg_ref[...], preferred_element_type=jnp.float32)
    # 4) single normalization (padding lanes have denom==0 -> guarded to 1).
    prob = e / jnp.where(denom > 0.0, denom, 1.0)
    prob_ref[...] = prob.astype(prob_ref.dtype)


def general_gating_forward(tdesc, params, num_mods, *,
                           compute_dtype=None, batch_tile=None):
    """Fused Pallas forward. Returns (prob_g, gating_wt) nested lists like PyTorch."""
    if tdesc is None:
        return None
    out_ind, count = build_out_ind(num_mods)
    chunk_bounds = tuple((lo, hi) for row in out_ind for (lo, hi) in row)

    w1 = params["w1"]                 # (tdim, inter_tdim)  -- stored pre-transposed
    w2 = params["w2"]                 # (inter_tdim, count) -- stored pre-transposed
    eps = params.get("bn_eps", 1e-5)
    scale = params["bn_gamma"] / jnp.sqrt(params["bn_var"] + eps)
    shift = params["bn_beta"] - params["bn_mean"] * scale

    B, K = tdesc.shape
    H = w1.shape[1]
    assert w1.shape[0] == K and w2.shape == (H, count)

    # Pad every width to a lane multiple; tile the batch (sublane multiple).
    Kp = _round_up(K, _LANE)
    Hp = _round_up(H, _LANE)
    Pp = _round_up(count, _LANE)
    TB = batch_tile or min(256, _round_up(B, _SUBLANE))
    TB = _round_up(TB, _SUBLANE)
    Bp = _round_up(B, TB)

    in_dtype = compute_dtype or tdesc.dtype        # pass bf16 here for MXU throughput
    x_p = _pad2d(tdesc, Bp, Kp).astype(in_dtype)
    # Fold the BN scale into W1 (in f32, before any compute-dtype cast).
    w1_folded = (w1.astype(jnp.float32) * scale.astype(jnp.float32)[None, :])
    w1_p = _pad2d(w1_folded, Kp, Hp).astype(in_dtype)
    w2_p = _pad2d(w2, Hp, Pp).astype(in_dtype)
    shift_p = _pad2d(shift.reshape(1, H).astype(jnp.float32), 1, Hp)

    # Block-diagonal segment-sum matrix for the chunk-wise softmax denominators.
    seg_np = np.zeros((Pp, Pp), np.float32)
    for lo, hi in chunk_bounds:
        seg_np[lo:hi, lo:hi] = 1.0
    seg_p = jnp.asarray(seg_np)

    out_dtype = tdesc.dtype
    itemsize = jnp.dtype(in_dtype).itemsize
    cost = pl.CostEstimate(
        flops=2 * Bp * (Kp * Hp + Hp * Pp + Pp * Pp),
        transcendentals=Bp * Pp,
        bytes_accessed=(Bp * Kp + Kp * Hp + Hp * Pp) * itemsize
        + (Hp + Pp * Pp) * 4
        + 2 * Bp * Pp * jnp.dtype(out_dtype).itemsize,
    )

    raw_p, prob_p = pl.pallas_call(
        functools.partial(_gating_kernel, chunk_bounds=chunk_bounds, count=count),
        out_shape=(jax.ShapeDtypeStruct((Bp, Pp), out_dtype),
                   jax.ShapeDtypeStruct((Bp, Pp), out_dtype)),
        grid=(Bp // TB,),
        in_specs=[
            pl.BlockSpec((TB, Kp), lambda i: (i, 0)),   # activation tile (pipelined)
            pl.BlockSpec((Kp, Hp), lambda i: (0, 0)),   # W1*scale: VMEM-resident
            pl.BlockSpec((1, Hp), lambda i: (0, 0)),    # BN shift
            pl.BlockSpec((Hp, Pp), lambda i: (0, 0)),   # W2: VMEM-resident
            pl.BlockSpec((Pp, Pp), lambda i: (0, 0)),   # segment-sum matrix
        ],
        out_specs=(pl.BlockSpec((TB, Pp), lambda i: (i, 0)),
                   pl.BlockSpec((TB, Pp), lambda i: (i, 0))),
        compiler_params=pltpu.CompilerParams(
            dimension_semantics=("parallel",)),
        cost_estimate=cost,
    )(x_p, w1_p, shift_p, w2_p, seg_p)

    raw = raw_p[:B, :count]
    prob = prob_p[:B, :count]
    gating_wt = [[raw[:, lo:hi] for (lo, hi) in row] for row in out_ind]
    prob_g = [[prob[:, lo:hi] for (lo, hi) in row] for row in out_ind]
    return prob_g, gating_wt


def init_params(key, num_mods, tdim, inter_tdim, randinit=False, bn_random=False):
    """Matches GeneralGatingNN init; weights stored pre-transposed as (IN, OUT)."""
    _, count = build_out_ind(num_mods)
    k1, k2, k3, k4 = jax.random.split(key, 4)
    w1 = 0.1 * jax.random.normal(k1, (tdim, inter_tdim), jnp.float32)
    if randinit:
        w2 = 0.1 * jax.random.normal(k2, (inter_tdim, count), jnp.float32)
    else:
        w2 = jnp.zeros((inter_tdim, count), jnp.float32)   # module zeroes joint_linear2
    if bn_random:
        # pretend-trained BN stats so the folded affine path is actually exercised.
        gamma = 1.0 + 0.1 * jax.random.normal(k3, (inter_tdim,), jnp.float32)
        beta = 0.1 * jax.random.normal(k4, (inter_tdim,), jnp.float32)
        mean = 0.05 * jax.random.normal(k3, (inter_tdim,), jnp.float32)
        var = jnp.abs(1.0 + 0.1 * jax.random.normal(k4, (inter_tdim,), jnp.float32))
    else:
        gamma = jnp.ones((inter_tdim,), jnp.float32)
        beta = jnp.zeros((inter_tdim,), jnp.float32)
        mean = jnp.zeros((inter_tdim,), jnp.float32)
        var = jnp.ones((inter_tdim,), jnp.float32)
    return dict(w1=w1, w2=w2, bn_gamma=gamma, bn_beta=beta,
                bn_mean=mean, bn_var=var, bn_eps=1e-5)


def general_gating_reference(tdesc, params, num_mods):
    """Pure-JAX reference mirroring the PyTorch forward (eval-mode BN)."""
    if tdesc is None:
        return None
    out_ind, _ = build_out_ind(num_mods)
    eps = params.get("bn_eps", 1e-5)
    scale = params["bn_gamma"] / jnp.sqrt(params["bn_var"] + eps)
    shift = params["bn_beta"] - params["bn_mean"] * scale
    h = jnp.maximum((tdesc @ params["w1"]) * scale + shift, 0.0)
    y = h @ params["w2"]
    gating = [[y[:, lo:hi] for (lo, hi) in row] for row in out_ind]
    prob = [[jax.nn.softmax(g, axis=-1) for g in row] for row in gating]
    return prob, gating


if __name__ == "__main__":
    key = jax.random.PRNGKey(0)
    num_mods = [3, 4, 5]            # chunks: [1] + [3]*4 + [4]*5  -> count = 33
    batch, tdim, inter_tdim = 8, 24, 32

    kx, kp = jax.random.split(key)
    x = jax.random.normal(kx, (batch, tdim), jnp.float32)
    params = init_params(kp, num_mods, tdim, inter_tdim, randinit=True, bn_random=True)

    prob_g, gating_wt = general_gating_forward(x, params, num_mods)
    jax.block_until_ready(jax.tree_util.tree_leaves((prob_g, gating_wt)))

    prob_ref, gating_ref = general_gating_reference(x, params, num_mods)

    out_ind, _ = build_out_ind(num_mods)
    for i in range(len(out_ind)):
        for j in range(len(out_ind[i])):
            assert gating_wt[i][j].shape == gating_ref[i][j].shape
            assert jnp.allclose(gating_wt[i][j], gating_ref[i][j],
                                atol=1e-5, rtol=1e-5), "gating_wt mismatch"
            assert jnp.allclose(prob_g[i][j], prob_ref[i][j],
                                atol=1e-5, rtol=1e-5), "prob_g mismatch"
            assert jnp.allclose(jnp.sum(prob_g[i][j], axis=-1), 1.0,
                                atol=1e-5), "softmax rows must sum to 1"
    print("KERNEL_OK")
</pallas_src>

<mosaic_0001>
module attributes {stable_mosaic.version = 11 : i64} {
  func.func @_gating_kernel(%arg0: i32, %arg1: memref<8x128xf32, #tpu.memory_space<vmem>>, %arg2: memref<128x128xf32, #tpu.memory_space<vmem>>, %arg3: memref<1x128xf32, #tpu.memory_space<vmem>>, %arg4: memref<128x128xf32, #tpu.memory_space<vmem>>, %arg5: memref<128x128xf32, #tpu.memory_space<vmem>>, %arg6: memref<8x128xf32, #tpu.memory_space<vmem>>, %arg7: memref<8x128xf32, #tpu.memory_space<vmem>>) attributes {dimension_semantics = [#tpu.dimension_semantics<parallel>], iteration_bounds = array<i64: 1>, scalar_prefetch = 0 : i64, scratch_operands = 0 : i64, tpu.core_type = #tpu.core_type<tc>, window_params = [{transform_indices = @transform_0, window_bounds = array<i64: 8, 128>}, {pipeline_mode = #tpu.pipeline_mode<synchronous>, transform_indices = @transform_1, window_bounds = array<i64: 128, 128>}, {pipeline_mode = #tpu.pipeline_mode<synchronous>, transform_indices = @transform_2, window_bounds = array<i64: 1, 128>}, {pipeline_mode = #tpu.pipeline_mode<synchronous>, transform_indices = @transform_3, window_bounds = array<i64: 128, 128>}, {pipeline_mode = #tpu.pipeline_mode<synchronous>, transform_indices = @transform_4, window_bounds = array<i64: 128, 128>}, {transform_indices = @transform_5, window_bounds = array<i64: 8, 128>}, {transform_indices = @transform_6, window_bounds = array<i64: 8, 128>}]} {
    %c0 = arith.constant 0 : index
    %c0_0 = arith.constant 0 : index
    %0 = vector.load %arg1[%c0, %c0_0] : memref<8x128xf32, #tpu.memory_space<vmem>>, vector<8x128xf32>
    %c0_1 = arith.constant 0 : index
    %c0_2 = arith.constant 0 : index
    %1 = vector.load %arg2[%c0_1, %c0_2] : memref<128x128xf32, #tpu.memory_space<vmem>>, vector<128x128xf32>
    %cst = arith.constant dense<0.000000e+00> : vector<8x128xf32>
    %2 = tpu.matmul %0, %1, %cst {dimension_numbers = #tpu.dot_dimension_numbers<[1], [0], [0], [1], [0, 0, 1, 1], [], []>} : vector<8x128xf32>, vector<128x128xf32>, vector<8x128xf32> -> vector<8x128xf32>
    %c0_3 = arith.constant 0 : index
    %c0_4 = arith.constant 0 : index
    %3 = vector.load %arg3[%c0_3, %c0_4] : memref<1x128xf32, #tpu.memory_space<vmem>>, vector<1x128xf32>
    %4 = vector.broadcast %3 : vector<1x128xf32> to vector<8x128xf32>
    %5 = arith.addf %2, %4 : vector<8x128xf32>
    %cst_5 = arith.constant 0.000000e+00 : f32
    %6 = vector.broadcast %cst_5 : f32 to vector<8x128xf32>
    %7 = arith.maximumf %5, %6 : vector<8x128xf32>
    %c0_6 = arith.constant 0 : index
    %c0_7 = arith.constant 0 : index
    %8 = vector.load %arg4[%c0_6, %c0_7] : memref<128x128xf32, #tpu.memory_space<vmem>>, vector<128x128xf32>
    %cst_8 = arith.constant dense<0.000000e+00> : vector<8x128xf32>
    %9 = tpu.matmul %7, %8, %cst_8 {dimension_numbers = #tpu.dot_dimension_numbers<[1], [0], [0], [1], [0, 0, 1, 1], [], []>} : vector<8x128xf32>, vector<128x128xf32>, vector<8x128xf32> -> vector<8x128xf32>
    %c0_9 = arith.constant 0 : index
    %c0_10 = arith.constant 0 : index
    %10 = vector.load %arg6[%c0_9, %c0_10] : memref<8x128xf32, #tpu.memory_space<vmem>>, vector<8x128xf32>
    tpu.vector_store %arg6[%c0_9, %c0_10], %9 {strides = array<i32>} : memref<8x128xf32, #tpu.memory_space<vmem>>, vector<8x128xf32>,
    %11 = tpu.iota {dimensions = array<i32: 1>} : vector<1x128xi32>
    %cst_11 = arith.constant 0.000000e+00 : f32
    %12 = vector.broadcast %cst_11 : f32 to vector<8x128xf32>
    %c0_i32 = arith.constant 0 : i32
    %13 = vector.broadcast %c0_i32 : i32 to vector<1x128xi32>
    %14 = arith.cmpi sge, %11, %13 : vector<1x128xi32>
    %c1_i32 = arith.constant 1 : i32
    %15 = vector.broadcast %c1_i32 : i32 to vector<1x128xi32>
    %16 = arith.cmpi slt, %11, %15 : vector<1x128xi32>
    %17 = arith.andi %14, %16 : vector<1x128xi1>
    %cst_12 = arith.constant 0xFF800000 : f32
    %18 = vector.shape_cast %17 : vector<1x128xi1> to vector<1x128xi1>
    %19 = vector.broadcast %18 : vector<1x128xi1> to vector<8x128xi1>
    %20 = vector.broadcast %cst_12 : f32 to vector<8x128xf32>
    %21 = arith.select %19, %9, %20 : vector<8x128xi1>, vector<8x128xf32>
    %cst_13 = arith.constant dense<0xFF800000> : vector<8xf32>
    %22 = vector.multi_reduction <maximumf>, %21, %cst_13 [1] : vector<8x128xf32> to vector<8xf32>
    %23 = vector.shape_cast %22 : vector<8xf32> to vector<8x1xf32>
    %24 = vector.shape_cast %17 : vector<1x128xi1> to vector<1x128xi1>
    %25 = vector.broadcast %24 : vector<1x128xi1> to vector<8x128xi1>
    %26 = vector.shape_cast %23 : vector<8x1xf32> to vector<8x1xf32>
    %27 = vector.broadcast %26 : vector<8x1xf32> to vector<8x128xf32>
    %28 = arith.select %25, %27, %12 : vector<8x128xi1>, vector<8x128xf32>
    %c1_i32_14 = arith.constant 1 : i32
    %29 = vector.broadcast %c1_i32_14 : i32 to vector<1x128xi32>
    %30 = arith.cmpi sge, %11, %29 : vector<1x128xi32>
    %c4_i32 = arith.constant 4 : i32
    %31 = vector.broadcast %c4_i32 : i32 to vector<1x128xi32>
    %32 = arith.cmpi slt, %11, %31 : vector<1x128xi32>
    %33 = arith.andi %30, %32 : vector<1x128xi1>
    %cst_15 = arith.constant 0xFF800000 : f32
    %34 = vector.shape_cast %33 : vector<1x128xi1> to vector<1x128xi1>
    %35 = vector.broadcast %34 : vector<1x128xi1> to vector<8x128xi1>
    %36 = vector.broadcast %cst_15 : f32 to vector<8x128xf32>
    %37 = arith.select %35, %9, %36 : vector<8x128xi1>, vector<8x128xf32>
    %cst_16 = arith.constant dense<0xFF800000> : vector<8xf32>
    %38 = vector.multi_reduction <maximumf>, %37, %cst_16 [1] : vector<8x128xf32> to vector<8xf32>
    %39 = vector.shape_cast %38 : vector<8xf32> to vector<8x1xf32>
    %40 = vector.shape_cast %33 : vector<1x128xi1> to vector<1x128xi1>
    %41 = vector.broadcast %40 : vector<1x128xi1> to vector<8x128xi1>
    %42 = vector.shape_cast %39 : vector<8x1xf32> to vector<8x1xf32>
    %43 = vector.broadcast %42 : vector<8x1xf32> to vector<8x128xf32>
    %44 = arith.select %41, %43, %28 : vector<8x128xi1>, vector<8x128xf32>
    %c4_i32_17 = arith.constant 4 : i32
    %45 = vector.broadcast %c4_i32_17 : i32 to vector<1x128xi32>
    %46 = arith.cmpi sge, %11, %45 : vector<1x128xi32>
    %c7_i32 = arith.constant 7 : i32
    %47 = vector.broadcast %c7_i32 : i32 to vector<1x128xi32>
    %48 = arith.cmpi slt, %11, %47 : vector<1x128xi32>
    %49 = arith.andi %46, %48 : vector<1x128xi1>
    %cst_18 = arith.constant 0xFF800000 : f32
    %50 = vector.shape_cast %49 : vector<1x128xi1> to vector<1x128xi1>
    %51 = vector.broadcast %50 : vector<1x128xi1> to vector<8x128xi1>
    %52 = vector.broadcast %cst_18 : f32 to vector<8x128xf32>
    %53 = arith.select %51, %9, %52 : vector<8x128xi1>, vector<8x128xf32>
    %cst_19 = arith.constant dense<0xFF800000> : vector<8xf32>
    %54 = vector.multi_reduction <maximumf>, %53, %cst_19 [1] : vector<8x128xf32> to vector<8xf32>
    %55 = vector.shape_cast %54 : vector<8xf32> to vector<8x1xf32>
    %56 = vector.shape_cast %49 : vector<1x128xi1> to vector<1x128xi1>
    %57 = vector.broadcast %56 : vector<1x128xi1> to vector<8x128xi1>
    %58 = vector.shape_cast %55 : vector<8x1xf32> to vector<8x1xf32>
    %59 = vector.broadcast %58 : vector<8x1xf32> to vector<8x128xf32>
    %60 = arith.select %57, %59, %44 : vector<8x128xi1>, vector<8x128xf32>
    %c7_i32_20 = arith.constant 7 : i32
    %61 = vector.broadcast %c7_i32_20 : i32 to vector<1x128xi32>
    %62 = arith.cmpi sge, %11, %61 : vector<1x128xi32>
    %c10_i32 = arith.constant 10 : i32
    %63 = vector.broadcast %c10_i32 : i32 to vector<1x128xi32>
    %64 = arith.cmpi slt, %11, %63 : vector<1x128xi32>
    %65 = arith.andi %62, %64 : vector<1x128xi1>
    %cst_21 = arith.constant 0xFF800000 : f32
    %66 = vector.shape_cast %65 : vector<1x128xi1> to vector<1x128xi1>
    %67 = vector.broadcast %66 : vector<1x128xi1> to vector<8x128xi1>
    %68 = vector.broadcast %cst_21 : f32 to vector<8x128xf32>
    %69 = arith.select %67, %9, %68 : vector<8x128xi1>, vector<8x128xf32>
    %cst_22 = arith.constant dense<0xFF800000> : vector<8xf32>
    %70 = vector.multi_reduction <maximumf>, %69, %cst_22 [1] : vector<8x128xf32> to vector<8xf32>
    %71 = vector.shape_cast %70 : vector<8xf32> to vector<8x1xf32>
    %72 = vector.shape_cast %65 : vector<1x128xi1> to vector<1x128xi1>
    %73 = vector.broadcast %72 : vector<1x128xi1> to vector<8x128xi1>
    %74 = vector.shape_cast %71 : vector<8x1xf32> to vector<8x1xf32>
    %75 = vector.broadcast %74 : vector<8x1xf32> to vector<8x128xf32>
    %76 = arith.select %73, %75, %60 : vector<8x128xi1>, vector<8x128xf32>
    %c10_i32_23 = arith.constant 10 : i32
    %77 = vector.broadcast %c10_i32_23 : i32 to vector<1x128xi32>
    %78 = arith.cmpi sge, %11, %77 : vector<1x128xi32>
    %c13_i32 = arith.constant 13 : i32
    %79 = vector.broadcast %c13_i32 : i32 to vector<1x128xi32>
    %80 = arith.cmpi slt, %11, %79 : vector<1x128xi32>
    %81 = arith.andi %78, %80 : vector<1x128xi1>
    %cst_24 = arith.constant 0xFF800000 : f32
    %82 = vector.shape_cast %81 : vector<1x128xi1> to vector<1x128xi1>
    %83 = vector.broadcast %82 : vector<1x128xi1> to vector<8x128xi1>
    %84 = vector.broadcast %cst_24 : f32 to vector<8x128xf32>
    %85 = arith.select %83, %9, %84 : vector<8x128xi1>, vector<8x128xf32>
    %cst_25 = arith.constant dense<0xFF800000> : vector<8xf32>
    %86 = vector.multi_reduction <maximumf>, %85, %cst_25 [1] : vector<8x128xf32> to vector<8xf32>
    %87 = vector.shape_cast %86 : vector<8xf32> to vector<8x1xf32>
    %88 = vector.shape_cast %81 : vector<1x128xi1> to vector<1x128xi1>
    %89 = vector.broadcast %88 : vector<1x128xi1> to vector<8x128xi1>
    %90 = vector.shape_cast %87 : vector<8x1xf32> to vector<8x1xf32>
    %91 = vector.broadcast %90 : vector<8x1xf32> to vector<8x128xf32>
    %92 = arith.select %89, %91, %76 : vector<8x128xi1>, vector<8x128xf32>
    %c13_i32_26 = arith.constant 13 : i32
    %93 = vector.broadcast %c13_i32_26 : i32 to vector<1x128xi32>
    %94 = arith.cmpi sge, %11, %93 : vector<1x128xi32>
    %c17_i32 = arith.constant 17 : i32
    %95 = vector.broadcast %c17_i32 : i32 to vector<1x128xi32>
    %96 = arith.cmpi slt, %11, %95 : vector<1x128xi32>
    %97 = arith.andi %94, %96 : vector<1x128xi1>
    %cst_27 = arith.constant 0xFF800000 : f32
    %98 = vector.shape_cast %97 : vector<1x128xi1> to vector<1x128xi1>
    %99 = vector.broadcast %98 : vector<1x128xi1> to vector<8x128xi1>
    %100 = vector.broadcast %cst_27 : f32 to vector<8x128xf32>
    %101 = arith.select %99, %9, %100 : vector<8x128xi1>, vector<8x128xf32>
    %cst_28 = arith.constant dense<0xFF800000> : vector<8xf32>
    %102 = vector.multi_reduction <maximumf>, %101, %cst_28 [1] : vector<8x128xf32> to vector<8xf32>
    %103 = vector.shape_cast %102 : vector<8xf32> to vector<8x1xf32>
    %104 = vector.shape_cast %97 : vector<1x128xi1> to vector<1x128xi1>
    %105 = vector.broadcast %104 : vector<1x128xi1> to vector<8x128xi1>
    %106 = vector.shape_cast %103 : vector<8x1xf32> to vector<8x1xf32>
    %107 = vector.broadcast %106 : vector<8x1xf32> to vector<8x128xf32>
    %108 = arith.select %105, %107, %92 : vector<8x128xi1>, vector<8x128xf32>
    %c17_i32_29 = arith.constant 17 : i32
    %109 = vector.broadcast %c17_i32_29 : i32 to vector<1x128xi32>
    %110 = arith.cmpi sge, %11, %109 : vector<1x128xi32>
    %c21_i32 = arith.constant 21 : i32
    %111 = vector.broadcast %c21_i32 : i32 to vector<1x128xi32>
    %112 = arith.cmpi slt, %11, %111 : vector<1x128xi32>
    %113 = arith.andi %110, %112 : vector<1x128xi1>
    %cst_30 = arith.constant 0xFF800000 : f32
    %114 = vector.shape_cast %113 : vector<1x128xi1> to vector<1x128xi1>
    %115 = vector.broadcast %114 : vector<1x128xi1> to vector<8x128xi1>
    %116 = vector.broadcast %cst_30 : f32 to vector<8x128xf32>
    %117 = arith.select %115, %9, %116 : vector<8x128xi1>, vector<8x128xf32>
    %cst_31 = arith.constant dense<0xFF800000> : vector<8xf32>
    %118 = vector.multi_reduction <maximumf>, %117, %cst_31 [1] : vector<8x128xf32> to vector<8xf32>
    %119 = vector.shape_cast %118 : vector<8xf32> to vector<8x1xf32>
    %120 = vector.shape_cast %113 : vector<1x128xi1> to vector<1x128xi1>
    %121 = vector.broadcast %120 : vector<1x128xi1> to vector<8x128xi1>
    %122 = vector.shape_cast %119 : vector<8x1xf32> to vector<8x1xf32>
    %123 = vector.broadcast %122 : vector<8x1xf32> to vector<8x128xf32>
    %124 = arith.select %121, %123, %108 : vector<8x128xi1>, vector<8x128xf32>
    %c21_i32_32 = arith.constant 21 : i32
    %125 = vector.broadcast %c21_i32_32 : i32 to vector<1x128xi32>
    %126 = arith.cmpi sge, %11, %125 : vector<1x128xi32>
    %c25_i32 = arith.constant 25 : i32
    %127 = vector.broadcast %c25_i32 : i32 to vector<1x128xi32>
    %128 = arith.cmpi slt, %11, %127 : vector<1x128xi32>
    %129 = arith.andi %126, %128 : vector<1x128xi1>
    %cst_33 = arith.constant 0xFF800000 : f32
    %130 = vector.shape_cast %129 : vector<1x128xi1> to vector<1x128xi1>
    %131 = vector.broadcast %130 : vector<1x128xi1> to vector<8x128xi1>
    %132 = vector.broadcast %cst_33 : f32 to vector<8x128xf32>
    %133 = arith.select %131, %9, %132 : vector<8x128xi1>, vector<8x128xf32>
    %cst_34 = arith.constant dense<0xFF800000> : vector<8xf32>
    %134 = vector.multi_reduction <maximumf>, %133, %cst_34 [1] : vector<8x128xf32> to vector<8xf32>
    %135 = vector.shape_cast %134 : vector<8xf32> to vector<8x1xf32>
    %136 = vector.shape_cast %129 : vector<1x128xi1> to vector<1x128xi1>
    %137 = vector.broadcast %136 : vector<1x128xi1> to vector<8x128xi1>
    %138 = vector.shape_cast %135 : vector<8x1xf32> to vector<8x1xf32>
    %139 = vector.broadcast %138 : vector<8x1xf32> to vector<8x128xf32>
    %140 = arith.select %137, %139, %124 : vector<8x128xi1>, vector<8x128xf32>
    %c25_i32_35 = arith.constant 25 : i32
    %141 = vector.broadcast %c25_i32_35 : i32 to vector<1x128xi32>
    %142 = arith.cmpi sge, %11, %141 : vector<1x128xi32>
    %c29_i32 = arith.constant 29 : i32
    %143 = vector.broadcast %c29_i32 : i32 to vector<1x128xi32>
    %144 = arith.cmpi slt, %11, %143 : vector<1x128xi32>
    %145 = arith.andi %142, %144 : vector<1x128xi1>
    %cst_36 = arith.constant 0xFF800000 : f32
    %146 = vector.shape_cast %145 : vector<1x128xi1> to vector<1x128xi1>
    %147 = vector.broadcast %146 : vector<1x128xi1> to vector<8x128xi1>
    %148 = vector.broadcast %cst_36 : f32 to vector<8x128xf32>
    %149 = arith.select %147, %9, %148 : vector<8x128xi1>, vector<8x128xf32>
    %cst_37 = arith.constant dense<0xFF800000> : vector<8xf32>
    %150 = vector.multi_reduction <maximumf>, %149, %cst_37 [1] : vector<8x128xf32> to vector<8xf32>
    %151 = vector.shape_cast %150 : vector<8xf32> to vector<8x1xf32>
    %152 = vector.shape_cast %145 : vector<1x128xi1> to vector<1x128xi1>
    %153 = vector.broadcast %152 : vector<1x128xi1> to vector<8x128xi1>
    %154 = vector.shape_cast %151 : vector<8x1xf32> to vector<8x1xf32>
    %155 = vector.broadcast %154 : vector<8x1xf32> to vector<8x128xf32>
    %156 = arith.select %153, %155, %140 : vector<8x128xi1>, vector<8x128xf32>
    %c29_i32_38 = arith.constant 29 : i32
    %157 = vector.broadcast %c29_i32_38 : i32 to vector<1x128xi32>
    %158 = arith.cmpi sge, %11, %157 : vector<1x128xi32>
    %c33_i32 = arith.constant 33 : i32
    %159 = vector.broadcast %c33_i32 : i32 to vector<1x128xi32>
    %160 = arith.cmpi slt, %11, %159 : vector<1x128xi32>
    %161 = arith.andi %158, %160 : vector<1x128xi1>
    %cst_39 = arith.constant 0xFF800000 : f32
    %162 = vector.shape_cast %161 : vector<1x128xi1> to vector<1x128xi1>
    %163 = vector.broadcast %162 : vector<1x128xi1> to vector<8x128xi1>
    %164 = vector.broadcast %cst_39 : f32 to vector<8x128xf32>
    %165 = arith.select %163, %9, %164 : vector<8x128xi1>, vector<8x128xf32>
    %cst_40 = arith.constant dense<0xFF800000> : vector<8xf32>
    %166 = vector.multi_reduction <maximumf>, %165, %cst_40 [1] : vector<8x128xf32> to vector<8xf32>
    %167 = vector.shape_cast %166 : vector<8xf32> to vector<8x1xf32>
    %168 = vector.shape_cast %161 : vector<1x128xi1> to vector<1x128xi1>
    %169 = vector.broadcast %168 : vector<1x128xi1> to vector<8x128xi1>
    %170 = vector.shape_cast %167 : vector<8x1xf32> to vector<8x1xf32>
    %171 = vector.broadcast %170 : vector<8x1xf32> to vector<8x128xf32>
    %172 = arith.select %169, %171, %156 : vector<8x128xi1>, vector<8x128xf32>
    %c33_i32_41 = arith.constant 33 : i32
    %173 = vector.broadcast %c33_i32_41 : i32 to vector<1x128xi32>
    %174 = arith.cmpi slt, %11, %173 : vector<1x128xi32>
    %175 = arith.subf %9, %172 : vector<8x128xf32>
    %176 = math.exp %175 : vector<8x128xf32>
    %cst_42 = arith.constant 0.000000e+00 : f32
    %177 = vector.shape_cast %174 : vector<1x128xi1> to vector<1x128xi1>
    %178 = vector.broadcast %177 : vector<1x128xi1> to vector<8x128xi1>
    %179 = vector.broadcast %cst_42 : f32 to vector<8x128xf32>
    %180 = arith.select %178, %176, %179 : vector<8x128xi1>, vector<8x128xf32>
    %c0_43 = arith.constant 0 : index
    %c0_44 = arith.constant 0 : index
    %181 = vector.load %arg5[%c0_43, %c0_44] : memref<128x128xf32, #tpu.memory_space<vmem>>, vector<128x128xf32>
    %cst_45 = arith.constant dense<0.000000e+00> : vector<8x128xf32>
    %182 = tpu.matmul %180, %181, %cst_45 {dimension_numbers = #tpu.dot_dimension_numbers<[1], [0], [0], [1], [0, 0, 1, 1], [], []>} : vector<8x128xf32>, vector<128x128xf32>, vector<8x128xf32> -> vector<8x128xf32>
    %cst_46 = arith.constant 0.000000e+00 : f32
    %183 = vector.broadcast %cst_46 : f32 to vector<8x128xf32>
    %184 = arith.cmpf ogt, %182, %183 : vector<8x128xf32>
    %cst_47 = arith.constant 1.000000e+00 : f32
    %185 = vector.broadcast %cst_47 : f32 to vector<8x128xf32>
    %186 = arith.select %184, %182, %185 : vector<8x128xi1>, vector<8x128xf32>
    %187 = arith.divf %180, %186 : vector<8x128xf32>
    %c0_48 = arith.constant 0 : index
    %c0_49 = arith.constant 0 : index
    %188 = vector.load %arg7[%c0_48, %c0_49] : memref<8x128xf32, #tpu.memory_space<vmem>>, vector<8x128xf32>
    tpu.vector_store %arg7[%c0_48, %c0_49], %187 {strides = array<i32>} : memref<8x128xf32, #tpu.memory_space<vmem>>, vector<8x128xf32>,
    return
  }
  func.func @transform_0(%arg0: i32) -> (i32, i32) {
    %c0_i32 = arith.constant 0 : i32
    %c0_i32_0 = arith.constant 0 : i32
    return %arg0, %c0_i32 : i32, i32
  }
  func.func @transform_1(%arg0: i32) -> (i32, i32) {
    %c0_i32 = arith.constant 0 : i32
    %c0_i32_0 = arith.constant 0 : i32
    %c0_i32_1 = arith.constant 0 : i32
    return %c0_i32, %c0_i32_0 : i32, i32
  }
  func.func @transform_2(%arg0: i32) -> (i32, i32) {
    %c0_i32 = arith.constant 0 : i32
    %c0_i32_0 = arith.constant 0 : i32
    %c0_i32_1 = arith.constant 0 : i32
    return %c0_i32, %c0_i32_0 : i32, i32
  }
  func.func @transform_3(%arg0: i32) -> (i32, i32) {
    %c0_i32 = arith.constant 0 : i32
    %c0_i32_0 = arith.constant 0 : i32
    %c0_i32_1 = arith.constant 0 : i32
    return %c0_i32, %c0_i32_0 : i32, i32
  }
  func.func @transform_4(%arg0: i32) -> (i32, i32) {
    %c0_i32 = arith.constant 0 : i32
    %c0_i32_0 = arith.constant 0 : i32
    %c0_i32_1 = arith.constant 0 : i32
    return %c0_i32, %c0_i32_0 : i32, i32
  }
  func.func @transform_5(%arg0: i32) -> (i32, i32) {
    %c0_i32 = arith.constant 0 : i32
    %c0_i32_0 = arith.constant 0 : i32
    return %arg0, %c0_i32 : i32, i32
  }
  func.func @transform_6(%arg0: i32) -> (i32, i32) {
    %c0_i32 = arith.constant 0 : i32
    %c0_i32_0 = arith.constant 0 : i32
    return %arg0, %c0_i32 : i32, i32
  }
}

</mosaic_0001>

<llo_original>
// kernel: tpu_custom_call.1
$region0: #{tpu_custom_call.1}
  #allocation0 [shape = 'u32[]', space=smem, size = 0x4, offset = 0x4, fixed_abs, tag = 'smem constant byte address 0x4 - core index']
  #allocation1 [shape = 'u32[144,128]{1,0:T(1,128)}', space=vmem, size = 0x12000, scoped, tag = 'internal scratch']
  %s0 = inlined_call_operand.hbm [shape: f32[8,128], index: 0, kind: input, shape index: {}]
  %s1 = inlined_call_operand.hbm [shape: f32[128,128], index: 1, kind: input, shape index: {}]
  %s2 = inlined_call_operand.vmem [shape: f32[1,128], index: 2, kind: input, shape index: {}]
  %s3 = inlined_call_operand.hbm [shape: f32[128,128], index: 3, kind: input, shape index: {}]
  %s4 = inlined_call_operand.hbm [shape: f32[128,128], index: 4, kind: input, shape index: {}]
  %s5 = inlined_call_operand.hbm [shape: f32[8,128], index: 5, kind: output, shape index: {0}]
  %s6 = inlined_call_operand.hbm [shape: f32[8,128], index: 6, kind: output, shape index: {1}]
  %7 = xla_tuple %s5, %s6
  %s8 = sld [smem:[#allocation0]]
  $region54: #{tpu_custom_call.1} parent=0
    _
  %s10 = ssub.s32 1, %s8
  %s11 = scalar_select 0, %s10, %s8
  $region1: #{tpu_custom_call.1} parent=0
    #allocation2 [shape = 'u8[4096]{0}', space=vmem, size = 0x1000, scoped, tag = 'input window, operand 0, single buffered']
    #allocation3 [shape = 's32[1]{0}', space=sflag, size = 0x4, scoped, tag = 'scoped memory for tpu_custom_call.1']
    #allocation4 [shape = 's32[1]{0}', space=sflag, size = 0x4, scoped, tag = 'scoped memory for tpu_custom_call.1']
    #allocation5 [shape = 'u8[65536]{0}', space=vmem, size = 0x10000, scoped, tag = 'input window, operand 1, single buffered']
    #allocation6 [shape = 's32[1]{0}', space=sflag, size = 0x4, scoped, tag = 'scoped memory for tpu_custom_call.1']
    #allocation7 [shape = 'u8[65536]{0}', space=vmem, size = 0x10000, scoped, tag = 'input window, operand 3, single buffered']
    #allocation8 [shape = 'u8[65536]{0}', space=vmem, size = 0x10000, scoped, tag = 'input window, operand 4, single buffered']
    #allocation9 [shape = 's32[1]{0}', space=sflag, size = 0x4, scoped, tag = 'scoped memory for tpu_custom_call.1']
    #allocation10 [shape = 'u8[4096]{0}', space=vmem, size = 0x1000, scoped, tag = 'output window, operand 0, single buffered']
    #allocation11 [shape = 'u8[4096]{0}', space=vmem, size = 0x1000, scoped, tag = 'output window, operand 1, single buffered']
    #allocation12 [shape = 's32[1]{0}', space=sflag, size = 0x4, scoped, tag = 'scoped memory for tpu_custom_call.1']
    %12 = vsyncpa [#allocation3], 0
    %13 = vsyncpa [#allocation6], 0
    %14 = vsyncpa [#allocation9], 0
    %15 = vsyncpa [#allocation4], 0
    %16 = vsyncpa [#allocation12], 0
    // Predicated region
    $region2: #{tpu_custom_call.1} parent=1 // pred_check
      _
    $region3: #{tpu_custom_call.1} parent=1 // pred_check_branch
      %18 = sbr.rel (0) target = $region5
    $region4: #{tpu_custom_call.1} parent=1 // pred_region
      %s20 = ssub.s32 128, 128
      %21 = vsyncadd [#allocation3], %s20
      %s23 = sshll.u32 [#allocation2], 4
      %s24 = int_to_ptr.vmem [resolvable:$true] %s23
      %26 = dma.hbm_to_vmem [thread:$0]  %s0, 128, %s24, [#allocation3]
    $region5: #{tpu_custom_call.1} parent=1 // pred_fallthru
      _
    // Predicated region
    $region6: #{tpu_custom_call.1} parent=1 // pred_check
      _
    $region7: #{tpu_custom_call.1} parent=1 // pred_check_branch
      %28 = sbr.rel (0) target = $region9
    $region8: #{tpu_custom_call.1} parent=1 // pred_region
      %s30 = ssub.s32 2048, 2048
      %31 = vsyncadd [#allocation6], %s30
      %s32 = sshll.u32 [#allocation5], 4
      %s33 = int_to_ptr.vmem [resolvable:$true] %s32
      %38 = dma.hbm_to_vmem [thread:$0]  %s1, 2048, %s33, [#allocation6], 128, 128, 8
    $region9: #{tpu_custom_call.1} parent=1 // pred_fallthru
      _
    // Predicated region
    $region10: #{tpu_custom_call.1} parent=1 // pred_check
      _
    $region11: #{tpu_custom_call.1} parent=1 // pred_check_branch
      %40 = sbr.rel (0) target = $region13
    $region12: #{tpu_custom_call.1} parent=1 // pred_region
      _
    $region13: #{tpu_custom_call.1} parent=1 // pred_fallthru
      _
    // Predicated region
    $region14: #{tpu_custom_call.1} parent=1 // pred_check
      _
    $region15: #{tpu_custom_call.1} parent=1 // pred_check_branch
      %42 = sbr.rel (0) target = $region17
    $region16: #{tpu_custom_call.1} parent=1 // pred_region
      %s44 = ssub.s32 2048, 2048
      %45 = vsyncadd [#allocation6], %s44
      %s46 = sshll.u32 [#allocation7], 4
      %s47 = int_to_ptr.vmem [resolvable:$true] %s46
      %52 = dma.hbm_to_vmem [thread:$0]  %s3, 2048, %s47, [#allocation6], 128, 128, 8
    $region17: #{tpu_custom_call.1} parent=1 // pred_fallthru
      _
    // Predicated region
    $region18: #{tpu_custom_call.1} parent=1 // pred_check
      _
    $region19: #{tpu_custom_call.1} parent=1 // pred_check_branch
      %54 = sbr.rel (0) target = $region21
    $region20: #{tpu_custom_call.1} parent=1 // pred_region
      %s56 = ssub.s32 2048, 2048
      %57 = vsyncadd [#allocation9], %s56
      %s58 = sshll.u32 [#allocation8], 4
      %s59 = int_to_ptr.vmem [resolvable:$true] %s58
      %64 = dma.hbm_to_vmem [thread:$0]  %s4, 2048, %s59, [#allocation9], 128, 128, 8
    $region21: #{tpu_custom_call.1} parent=1 // pred_fallthru
      _
    // Predicated region
    $region22: #{tpu_custom_call.1} parent=1 // pred_check
      _
    $region23: #{tpu_custom_call.1} parent=1 // pred_check_branch
      %66 = sbr.rel (0) target = $region25
    $region24: #{tpu_custom_call.1} parent=1 // pred_region
      %67 = dma.done [#allocation3], 128
    $region25: #{tpu_custom_call.1} parent=1 // pred_fallthru
      _
    // Predicated region
    $region26: #{tpu_custom_call.1} parent=1 // pred_check
      _
    $region27: #{tpu_custom_call.1} parent=1 // pred_check_branch
      %69 = sbr.rel (0) target = $region29
    $region28: #{tpu_custom_call.1} parent=1 // pred_region
      %70 = dma.done [#allocation6], 2048
    $region29: #{tpu_custom_call.1} parent=1 // pred_fallthru
      _
    // Predicated region
    $region30: #{tpu_custom_call.1} parent=1 // pred_check
      _
    $region31: #{tpu_custom_call.1} parent=1 // pred_check_branch
      %72 = sbr.rel (0) target = $region33
    $region32: #{tpu_custom_call.1} parent=1 // pred_region
      %73 = dma.done [#allocation6], 2048
    $region33: #{tpu_custom_call.1} parent=1 // pred_fallthru
      _
    // Predicated region
    $region34: #{tpu_custom_call.1} parent=1 // pred_check
      _
    $region35: #{tpu_custom_call.1} parent=1 // pred_check_branch
      %75 = sbr.rel (0) target = $region37
    $region36: #{tpu_custom_call.1} parent=1 // pred_region
      %76 = dma.done [#allocation9], 2048
    $region37: #{tpu_custom_call.1} parent=1 // pred_fallthru
      _
    %v77 = vld [vmem:[#allocation2] sm:$0xff]
    %v78 = vld [vmem:[#allocation5] sm:$0xff]
    %v79 = vld [vmem:[#allocation5 + $0x8] sm:$0xff]
    %v80 = vld [vmem:[#allocation5 + $0x10] sm:$0xff]
    %v81 = vld [vmem:[#allocation5 + $0x18] sm:$0xff]
    %v82 = vld [vmem:[#allocation5 + $0x20] sm:$0xff]
    %v83 = vld [vmem:[#allocation5 + $0x28] sm:$0xff]
    %v84 = vld [vmem:[#allocation5 + $0x30] sm:$0xff]
    %v85 = vld [vmem:[#allocation5 + $0x38] sm:$0xff]
    %v86 = vld [vmem:[#allocation5 + $0x40] sm:$0xff]
    %v87 = vld [vmem:[#allocation5 + $0x48] sm:$0xff]
    %v88 = vld [vmem:[#allocation5 + $0x50] sm:$0xff]
    %v89 = vld [vmem:[#allocation5 + $0x58] sm:$0xff]
    %v90 = vld [vmem:[#allocation5 + $0x60] sm:$0xff]
    %v91 = vld [vmem:[#allocation5 + $0x68] sm:$0xff]
    %v92 = vld [vmem:[#allocation5 + $0x70] sm:$0xff]
    %v93 = vld [vmem:[#allocation5 + $0x78] sm:$0xff]
    %v94 = vld [vmem:[%s2] sm:$0x1]
    %v96 = vlaneseq
    %v97 = vshrl.u32 %v96, 7
    %v98 = vsub.s32 0, %v97
    %v99 = vrot.slane %v94, %v98
    %101 = vmatprep.subr.mxu0 0.0
    %102 = vmatpush1.msra.mxu0 %v93
    %103 = vmatprep.subr.mxu0 0.0
    %104 = vmatpush1.msra.mxu0 %v92
    %105 = vmatprep.subr.mxu0 0.0
    %106 = vmatpush1.msra.mxu0 %v91
    %107 = vmatprep.subr.mxu0 0.0
    %108 = vmatpush1.msra.mxu0 %v90
    %109 = vmatprep.subr.mxu0 0.0
    %110 = vmatpush1.msra.mxu0 %v89
    %111 = vmatprep.subr.mxu0 0.0
    %112 = vmatpush1.msra.mxu0 %v88
    %113 = vmatprep.subr.mxu0 0.0
    %114 = vmatpush1.msra.mxu0 %v87
    %115 = vmatprep.subr.mxu0 0.0
    %116 = vmatpush1.msra.mxu0 %v86
    %117 = vmatprep.subr.mxu0 0.0
    %118 = vmatpush1.msra.mxu0 %v85
    %119 = vmatprep.subr.mxu0 0.0
    %120 = vmatpush1.msra.mxu0 %v84
    %121 = vmatprep.subr.mxu0 0.0
    %122 = vmatpush1.msra.mxu0 %v83
    %123 = vmatprep.subr.mxu0 0.0
    %124 = vmatpush1.msra.mxu0 %v82
    %125 = vmatprep.subr.mxu0 0.0
    %126 = vmatpush1.msra.mxu0 %v81
    %127 = vmatprep.subr.mxu0 0.0
    %128 = vmatpush1.msra.mxu0 %v80
    %129 = vmatprep.subr.mxu0 0.0
    %130 = vmatpush1.msra.mxu0 %v79
    %131 = vmatprep.subr.mxu0 0.0
    %132 = vmatpush1.msra.mxu0 %v78
    %133 = vmatprep.subr.mxu0 0.0
    %134 = vmatpush2.msra.mxu0 0.0
    %135 = vmatprep.subr.mxu0 0.0
    %136 = vmatpush2.msra.mxu0 0.0
    %137 = vmatprep.subr.mxu0 0.0
    %138 = vmatpush2.msra.mxu0 0.0
    %139 = vmatprep.subr.mxu0 0.0
    %140 = vmatpush2.msra.mxu0 0.0
    %141 = vmatprep.subr.mxu0 0.0
    %142 = vmatpush2.msra.mxu0 0.0
    %143 = vmatprep.subr.mxu0 0.0
    %144 = vmatpush2.msra.mxu0 0.0
    %145 = vmatprep.subr.mxu0 0.0
    %146 = vmatpush2.msra.mxu0 0.0
    %147 = vmatprep.subr.mxu0 0.0
    %148 = vmatpush2.msra.mxu0 0.0
    %149 = vmatprep.subr.mxu0 0.0
    %150 = vmatpush2.msra.mxu0 0.0
    %151 = vmatprep.subr.mxu0 0.0
    %152 = vmatpush2.msra.mxu0 0.0
    %153 = vmatprep.subr.mxu0 0.0
    %154 = vmatpush2.msra.mxu0 0.0
    %155 = vmatprep.subr.mxu0 0.0
    %156 = vmatpush2.msra.mxu0 0.0
    %157 = vmatprep.subr.mxu0 0.0
    %158 = vmatpush2.msra.mxu0 0.0
    %159 = vmatprep.subr.mxu0 0.0
    %160 = vmatpush2.msra.mxu0 0.0
    %161 = vmatprep.subr.mxu0 0.0
    %162 = vmatpush2.msra.mxu0 0.0
    %163 = vmatprep.subr.mxu0 0.0
    %164 = vmatpush2.msra.mxu0 0.0
    %165 = vmatprep.mubr.f32.mxu0 0.0
    %166 = vmatmul.mubr.f32.gmra.mxu0 %v77
    %v167 = vpop.f32.mrf.mxu0
    %v168 = vadd.f32 %v99, %v167
    %v169 = vpop.f32.mrf.mxu0
    %170 = vdwg.mxu0
    %v171 = vmax.f32 %v168, 0.0
    %v172 = vld [vmem:[#allocation7] sm:$0xff]
    %v173 = vld [vmem:[#allocation7 + $0x8] sm:$0xff]
    %v174 = vld [vmem:[#allocation7 + $0x10] sm:$0xff]
    %v175 = vld [vmem:[#allocation7 + $0x18] sm:$0xff]
    %v176 = vld [vmem:[#allocation7 + $0x20] sm:$0xff]
    %v177 = vld [vmem:[#allocation7 + $0x28] sm:$0xff]
    %v178 = vld [vmem:[#allocation7 + $0x30] sm:$0xff]
    %v179 = vld [vmem:[#allocation7 + $0x38] sm:$0xff]
    %v180 = vld [vmem:[#allocation7 + $0x40] sm:$0xff]
    %v181 = vld [vmem:[#allocation7 + $0x48] sm:$0xff]
    %v182 = vld [vmem:[#allocation7 + $0x50] sm:$0xff]
    %v183 = vld [vmem:[#allocation7 + $0x58] sm:$0xff]
    %v184 = vld [vmem:[#allocation7 + $0x60] sm:$0xff]
    %v185 = vld [vmem:[#allocation7 + $0x68] sm:$0xff]
    %v186 = vld [vmem:[#allocation7 + $0x70] sm:$0xff]
    %v187 = vld [vmem:[#allocation7 + $0x78] sm:$0xff]
    %188 = vmatprep.subr.mxu0 0.0
    %189 = vmatpush1.msra.mxu0 %v187
    %190 = vmatprep.subr.mxu0 0.0
    %191 = vmatpush1.msra.mxu0 %v186
    %192 = vmatprep.subr.mxu0 0.0
    %193 = vmatpush1.msra.mxu0 %v185
    %194 = vmatprep.subr.mxu0 0.0
    %195 = vmatpush1.msra.mxu0 %v184
    %196 = vmatprep.subr.mxu0 0.0
    %197 = vmatpush1.msra.mxu0 %v183
    %198 = vmatprep.subr.mxu0 0.0
    %199 = vmatpush1.msra.mxu0 %v182
    %200 = vmatprep.subr.mxu0 0.0
    %201 = vmatpush1.msra.mxu0 %v181
    %202 = vmatprep.subr.mxu0 0.0
    %203 = vmatpush1.msra.mxu0 %v180
    %204 = vmatprep.subr.mxu0 0.0
    %205 = vmatpush1.msra.mxu0 %v179
    %206 = vmatprep.subr.mxu0 0.0
    %207 = vmatpush1.msra.mxu0 %v178
    %208 = vmatprep.subr.mxu0 0.0
    %209 = vmatpush1.msra.mxu0 %v177
    %210 = vmatprep.subr.mxu0 0.0
    %211 = vmatpush1.msra.mxu0 %v176
    %212 = vmatprep.subr.mxu0 0.0
    %213 = vmatpush1.msra.mxu0 %v175
    %214 = vmatprep.subr.mxu0 0.0
    %215 = vmatpush1.msra.mxu0 %v174
    %216 = vmatprep.subr.mxu0 0.0
    %217 = vmatpush1.msra.mxu0 %v173
    %218 = vmatprep.subr.mxu0 0.0
    %219 = vmatpush1.msra.mxu0 %v172
    %220 = vmatprep.subr.mxu0 0.0
    %221 = vmatpush2.msra.mxu0 0.0
    %222 = vmatprep.subr.mxu0 0.0
    %223 = vmatpush2.msra.mxu0 0.0
    %224 = vmatprep.subr.mxu0 0.0
    %225 = vmatpush2.msra.mxu0 0.0
    %226 = vmatprep.subr.mxu0 0.0
    %227 = vmatpush2.msra.mxu0 0.0
    %228 = vmatprep.subr.mxu0 0.0
    %229 = vmatpush2.msra.mxu0 0.0
    %230 = vmatprep.subr.mxu0 0.0
    %231 = vmatpush2.msra.mxu0 0.0
    %232 = vmatprep.subr.mxu0 0.0
    %233 = vmatpush2.msra.mxu0 0.0
    %234 = vmatprep.subr.mxu0 0.0
    %235 = vmatpush2.msra.mxu0 0.0
    %236 = vmatprep.subr.mxu0 0.0
    %237 = vmatpush2.msra.mxu0 0.0
    %238 = vmatprep.subr.mxu0 0.0
    %239 = vmatpush2.msra.mxu0 0.0
    %240 = vmatprep.subr.mxu0 0.0
    %241 = vmatpush2.msra.mxu0 0.0
    %242 = vmatprep.subr.mxu0 0.0
    %243 = vmatpush2.msra.mxu0 0.0
    %244 = vmatprep.subr.mxu0 0.0
    %245 = vmatpush2.msra.mxu0 0.0
    %246 = vmatprep.subr.mxu0 0.0
    %247 = vmatpush2.msra.mxu0 0.0
    %248 = vmatprep.subr.mxu0 0.0
    %249 = vmatpush2.msra.mxu0 0.0
    %250 = vmatprep.subr.mxu0 0.0
    %251 = vmatpush2.msra.mxu0 0.0
    %252 = vmatprep.mubr.f32.mxu0 0.0
    %253 = vmatmul.mubr.f32.gmra.mxu0 %v171
    %v254 = vpop.f32.mrf.mxu0
    %v255 = vadd.f32 0.0, %v254
    %v256 = vpop.f32.mrf.mxu0
    %257 = vdwg.mxu0
    %258 = vst [vmem:[#allocation10] sm:$0xff] %v255
    %v259 = vlaneseq
    %v260 = vand.u32 %v259, 127
    %vm261 = vcmp.ge.s32.totalorder %v260, 0
    %vm262 = vcmp.lt.s32.totalorder %v260, 1
    %vm263 = vmand %vm261, %vm262
    %v264 = vsel %vm263, 1, 0
    %vm265 = vcmp.eq.s32.totalorder %v264, 1
    %v266 = vsel %vm265, %v255, -inf
    %267 = vmax.xlane.f32.xlu0 %v266
    %v268 = vpop.xlane.xlu0 %267
    %v269 = vsel %vm265, %v268, 0.0
    %vm270 = vcmp.ge.s32.totalorder %v260, 1
    %vm271 = vcmp.lt.s32.totalorder %v260, 4
    %vm272 = vmand %vm270, %vm271
    %v273 = vsel %vm272, 1, 0
    %vm274 = vcmp.eq.s32.totalorder %v273, 1
    %v275 = vsel %vm274, %v255, -inf
    %276 = vmax.xlane.f32.xlu0 %v275
    %v277 = vpop.xlane.xlu0 %276
    %v278 = vsel %vm274, %v277, %v269
    %vm279 = vcmp.ge.s32.totalorder %v260, 4
    %vm280 = vcmp.lt.s32.totalorder %v260, 7
    %vm281 = vmand %vm279, %vm280
    %v282 = vsel %vm281, 1, 0
    %vm283 = vcmp.eq.s32.totalorder %v282, 1
    %v284 = vsel %vm283, %v255, -inf
    %285 = vmax.xlane.f32.xlu0 %v284
    %v286 = vpop.xlane.xlu0 %285
    %v287 = vsel %vm283, %v286, %v278
    %vm288 = vcmp.ge.s32.totalorder %v260, 7
    %vm289 = vcmp.lt.s32.totalorder %v260, 10
    %vm290 = vmand %vm288, %vm289
    %v291 = vsel %vm290, 1, 0
    %vm292 = vcmp.eq.s32.totalorder %v291, 1
    %v293 = vsel %vm292, %v255, -inf
    %294 = vmax.xlane.f32.xlu0 %v293
    %v295 = vpop.xlane.xlu0 %294
    %v296 = vsel %vm292, %v295, %v287
    %vm297 = vcmp.ge.s32.totalorder %v260, 10
    %vm298 = vcmp.lt.s32.totalorder %v260, 13
    %vm299 = vmand %vm297, %vm298
    %v300 = vsel %vm299, 1, 0
    %vm301 = vcmp.eq.s32.totalorder %v300, 1
    %v302 = vsel %vm301, %v255, -inf
    %303 = vmax.xlane.f32.xlu0 %v302
    %v304 = vpop.xlane.xlu0 %303
    %v305 = vsel %vm301, %v304, %v296
    %vm306 = vcmp.ge.s32.totalorder %v260, 13
    %vm307 = vcmp.lt.s32.totalorder %v260, 17
    %vm308 = vmand %vm306, %vm307
    %v309 = vsel %vm308, 1, 0
    %vm310 = vcmp.eq.s32.totalorder %v309, 1
    %v311 = vsel %vm310, %v255, -inf
    %312 = vmax.xlane.f32.xlu0 %v311
    %v313 = vpop.xlane.xlu0 %312
    %v314 = vsel %vm310, %v313, %v305
    %vm315 = vcmp.ge.s32.totalorder %v260, 17
    %vm316 = vcmp.lt.s32.totalorder %v260, 21
    %vm317 = vmand %vm315, %vm316
    %v318 = vsel %vm317, 1, 0
    %vm319 = vcmp.eq.s32.totalorder %v318, 1
    %v320 = vsel %vm319, %v255, -inf
    %321 = vmax.xlane.f32.xlu0 %v320
    %v322 = vpop.xlane.xlu0 %321
    %v323 = vsel %vm319, %v322, %v314
    %vm324 = vcmp.ge.s32.totalorder %v260, 21
    %vm325 = vcmp.lt.s32.totalorder %v260, 25
    %vm326 = vmand %vm324, %vm325
    %v327 = vsel %vm326, 1, 0
    %vm328 = vcmp.eq.s32.totalorder %v327, 1
    %v329 = vsel %vm328, %v255, -inf
    %330 = vmax.xlane.f32.xlu0 %v329
    %v331 = vpop.xlane.xlu0 %330
    %v332 = vsel %vm328, %v331, %v323
    %vm333 = vcmp.ge.s32.totalorder %v260, 25
    %vm334 = vcmp.lt.s32.totalorder %v260, 29
    %vm335 = vmand %vm333, %vm334
    %v336 = vsel %vm335, 1, 0
    %vm337 = vcmp.eq.s32.totalorder %v336, 1
    %v338 = vsel %vm337, %v255, -inf
    %339 = vmax.xlane.f32.xlu0 %v338
    %v340 = vpop.xlane.xlu0 %339
    %v341 = vsel %vm337, %v340, %v332
    %vm342 = vcmp.ge.s32.totalorder %v260, 29
    %vm343 = vcmp.lt.s32.totalorder %v260, 33
    %vm344 = vmand %vm342, %vm343
    %v345 = vsel %vm344, 1, 0
    %vm346 = vcmp.eq.s32.totalorder %v345, 1
    %v347 = vsel %vm346, %v255, -inf
    %348 = vmax.xlane.f32.xlu0 %v347
    %v349 = vpop.xlane.xlu0 %348
    %v350 = vsel %vm346, %v349, %v341
    %v351 = vsub.f32 %v255, %v350
    %v352 = vmul.f32 %v351, 1.442695
    %v353 = vpow.pop %v352
    %v354 = vsel %vm343, 1, 0
    %vm355 = vcmp.eq.s32.totalorder %v354, 1
    %v356 = vsel %vm355, %v353, 0.0
    %v357 = vld [vmem:[#allocation8] sm:$0xff]
    %v358 = vld [vmem:[#allocation8 + $0x8] sm:$0xff]
    %v359 = vld [vmem:[#allocation8 + $0x10] sm:$0xff]
    %v360 = vld [vmem:[#allocation8 + $0x18] sm:$0xff]
    %v361 = vld [vmem:[#allocation8 + $0x20] sm:$0xff]
    %v362 = vld [vmem:[#allocation8 + $0x28] sm:$0xff]
    %v363 = vld [vmem:[#allocation8 + $0x30] sm:$0xff]
    %v364 = vld [vmem:[#allocation8 + $0x38] sm:$0xff]
    %v365 = vld [vmem:[#allocation8 + $0x40] sm:$0xff]
    %v366 = vld [vmem:[#allocation8 + $0x48] sm:$0xff]
    %v367 = vld [vmem:[#allocation8 + $0x50] sm:$0xff]
    %v368 = vld [vmem:[#allocation8 + $0x58] sm:$0xff]
    %v369 = vld [vmem:[#allocation8 + $0x60] sm:$0xff]
    %v370 = vld [vmem:[#allocation8 + $0x68] sm:$0xff]
    %v371 = vld [vmem:[#allocation8 + $0x70] sm:$0xff]
    %v372 = vld [vmem:[#allocation8 + $0x78] sm:$0xff]
    %373 = vmatprep.subr.mxu0 0.0
    %374 = vmatpush1.msra.mxu0 %v372
    %375 = vmatprep.subr.mxu0 0.0
    %376 = vmatpush1.msra.mxu0 %v371
    %377 = vmatprep.subr.mxu0 0.0
    %378 = vmatpush1.msra.mxu0 %v370
    %379 = vmatprep.subr.mxu0 0.0
    %380 = vmatpush1.msra.mxu0 %v369
    %381 = vmatprep.subr.mxu0 0.0
    %382 = vmatpush1.msra.mxu0 %v368
    %383 = vmatprep.subr.mxu0 0.0
    %384 = vmatpush1.msra.mxu0 %v367
    %385 = vmatprep.subr.mxu0 0.0
    %386 = vmatpush1.msra.mxu0 %v366
    %387 = vmatprep.subr.mxu0 0.0
    %388 = vmatpush1.msra.mxu0 %v365
    %389 = vmatprep.subr.mxu0 0.0
    %390 = vmatpush1.msra.mxu0 %v364
    %391 = vmatprep.subr.mxu0 0.0
    %392 = vmatpush1.msra.mxu0 %v363
    %393 = vmatprep.subr.mxu0 0.0
    %394 = vmatpush1.msra.mxu0 %v362
    %395 = vmatprep.subr.mxu0 0.0
    %396 = vmatpush1.msra.mxu0 %v361
    %397 = vmatprep.subr.mxu0 0.0
    %398 = vmatpush1.msra.mxu0 %v360
    %399 = vmatprep.subr.mxu0 0.0
    %400 = vmatpush1.msra.mxu0 %v359
    %401 = vmatprep.subr.mxu0 0.0
    %402 = vmatpush1.msra.mxu0 %v358
    %403 = vmatprep.subr.mxu0 0.0
    %404 = vmatpush1.msra.mxu0 %v357
    %405 = vmatprep.subr.mxu0 0.0
    %406 = vmatpush2.msra.mxu0 0.0
    %407 = vmatprep.subr.mxu0 0.0
    %408 = vmatpush2.msra.mxu0 0.0
    %409 = vmatprep.subr.mxu0 0.0
    %410 = vmatpush2.msra.mxu0 0.0
    %411 = vmatprep.subr.mxu0 0.0
    %412 = vmatpush2.msra.mxu0 0.0
    %413 = vmatprep.subr.mxu0 0.0
    %414 = vmatpush2.msra.mxu0 0.0
    %415 = vmatprep.subr.mxu0 0.0
    %416 = vmatpush2.msra.mxu0 0.0
    %417 = vmatprep.subr.mxu0 0.0
    %418 = vmatpush2.msra.mxu0 0.0
    %419 = vmatprep.subr.mxu0 0.0
    %420 = vmatpush2.msra.mxu0 0.0
    %421 = vmatprep.subr.mxu0 0.0
    %422 = vmatpush2.msra.mxu0 0.0
    %423 = vmatprep.subr.mxu0 0.0
    %424 = vmatpush2.msra.mxu0 0.0
    %425 = vmatprep.subr.mxu0 0.0
    %426 = vmatpush2.msra.mxu0 0.0
    %427 = vmatprep.subr.mxu0 0.0
    %428 = vmatpush2.msra.mxu0 0.0
    %429 = vmatprep.subr.mxu0 0.0
    %430 = vmatpush2.msra.mxu0 0.0
    %431 = vmatprep.subr.mxu0 0.0
    %432 = vmatpush2.msra.mxu0 0.0
    %433 = vmatprep.subr.mxu0 0.0
    %434 = vmatpush2.msra.mxu0 0.0
    %435 = vmatprep.subr.mxu0 0.0
    %436 = vmatpush2.msra.mxu0 0.0
    %437 = vmatprep.mubr.f32.mxu0 0.0
    %438 = vmatmul.mubr.f32.gmra.mxu0 %v356
    %v439 = vpop.f32.mrf.mxu0
    %v440 = vadd.f32 0.0, %v439
    %v441 = vpop.f32.mrf.mxu0
    %442 = vdwg.mxu0
    %vm443 = vcmp.gt.f32.partialorder %v440, 0.0
    %v444 = vsel %vm443, %v440, 1.0
    %v445 = vrcp.pop %v444
    %v446 = vmul.f32 %v356, %v445
    %447 = vst [vmem:[#allocation11] sm:$0xff] %v446
    // Predicated region
    $region38: #{tpu_custom_call.1} parent=1 // pred_check
      _
    $region39: #{tpu_custom_call.1} parent=1 // pred_check_branch
      %449 = sbr.rel (0) target = $region41
    $region40: #{tpu_custom_call.1} parent=1 // pred_region
      %s451 = ssub.s32 128, 128
      %452 = vsyncadd [#allocation4], %s451
      %s454 = sshll.u32 [#allocation10], 4
      %s455 = int_to_ptr.vmem [resolvable:$true] %s454
      %457 = dma.vmem_to_hbm [thread:$0]  %s455, 128, %s5, [#allocation4]
    $region41: #{tpu_custom_call.1} parent=1 // pred_fallthru
      _
    // Predicated region
    $region42: #{tpu_custom_call.1} parent=1 // pred_check
      _
    $region43: #{tpu_custom_call.1} parent=1 // pred_check_branch
      %459 = sbr.rel (0) target = $region45
    $region44: #{tpu_custom_call.1} parent=1 // pred_region
      %s461 = ssub.s32 128, 128
      %462 = vsyncadd [#allocation12], %s461
      %s464 = sshll.u32 [#allocation11], 4
      %s465 = int_to_ptr.vmem [resolvable:$true] %s464
      %467 = dma.vmem_to_hbm [thread:$0]  %s465, 128, %s6, [#allocation12]
    $region45: #{tpu_custom_call.1} parent=1 // pred_fallthru
      _
    // Predicated region
    $region46: #{tpu_custom_call.1} parent=1 // pred_check
      _
    $region47: #{tpu_custom_call.1} parent=1 // pred_check_branch
      %469 = sbr.rel (0) target = $region49
    $region48: #{tpu_custom_call.1} parent=1 // pred_region
      %470 = dma.done [#allocation4], 128
    $region49: #{tpu_custom_call.1} parent=1 // pred_fallthru
      _
    // Predicated region
    $region50: #{tpu_custom_call.1} parent=1 // pred_check
      _
    $region51: #{tpu_custom_call.1} parent=1 // pred_check_branch
      %472 = sbr.rel (0) target = $region53
    $region52: #{tpu_custom_call.1} parent=1 // pred_region
      %473 = dma.done [#allocation12], 128
    $region53: #{tpu_custom_call.1} parent=1 // pred_fallthru
      _
    %474 = vsyncpa [#allocation3], 1
    %475 = vsyncpa [#allocation6], 1
    %476 = vsyncpa [#allocation9], 1
    %477 = vsyncpa [#allocation4], 1
    %478 = vsyncpa [#allocation12], 1

</llo_original>
